<compile_context>
chip_gen: v7x
topology: tpu7x:2x2x1
jax: 0.10.0
libtpu: 0.0.40
codegen_flags: <defaults>
</compile_context>

<pallas_src>
import functools

import jax
import jax.numpy as jnp
from jax.experimental import pallas as pl
from jax.experimental.pallas import tpu as pltpu


# ------------------------------ kernel ------------------------------

def _fusion_kernel(t_ref, f_ref, wa_ref, wb_ref, bias_ref, o_ref, *,
                   inter, mode, bb):
    I = inter

    # Hoist all parameter reads / slices so the bb-unrolled loop and the
    # mode != 0 second pass reuse them (JAX does not CSE these).
    wa = wa_ref[...]                        # (2I, C) = [w1^T ; wg1^T]
    wb = wb_ref[...]                        # (C, 2I) = [w2^T , wg2^T]
    bias = bias_ref[...]                    # (R, 3)  = [b1 | bg1 | b2+bg2]
    C = wb.shape[0]
    b1 = bias[:I, 0:1]                      # (I, 1)
    bg1 = bias[:I, 1:2]                     # (I, 1)
    b2s = bias[:C, 2:3]                     # (C, 1) == b2 + bg2

    hw = t_ref.shape[-1]
    inv_hw = 1.0 / hw

    def att_weights(x):                     # x: (C, HW) f32 -> softmax weights
        # Fused first layer: one (2I, C) @ (C, HW) MXU call covers both the
        # local conv and (via pool-commutation) the global conv.
        h = jnp.dot(wa, x, preferred_element_type=jnp.float32)          # (2I, HW)
        h1 = jnp.maximum(h[:I, :] + b1, 0.0)                            # (I, HW)
        # global branch: pool after the linear map (commutes), then bias+ReLU
        g1 = jnp.maximum(
            jnp.sum(h[I:, :], axis=-1, keepdims=True) * inv_hw + bg1, 0.0)  # (I, 1)
        # Fused second layer: one (C, 2I) @ (2I, HW) MXU call.
        h_cat = jnp.concatenate([h1, jnp.broadcast_to(g1, h1.shape)], axis=0)
        xlg = jnp.dot(wb, h_cat, preferred_element_type=jnp.float32) + b2s  # (C, HW)
        # softmax over channels (sublane axis); exact division (compute slack).
        m = jnp.max(xlg, axis=0, keepdims=True)
        e = jnp.exp(xlg - m)
        return e / jnp.sum(e, axis=0, keepdims=True)

    # bb is a small static batch block; unroll in Python (DMA-bound kernel).
    for b in range(bb):
        t = t_ref[b].astype(jnp.float32)    # (C, HW) — f32 accumulation
        f = f_ref[b].astype(jnp.float32)
        d = t - f                           # reused by both blends
        wei = att_weights(t + f)
        xi = f + d * wei                    # == t*wei + f*(1-wei)
        if mode != 0:
            xi = f + d * att_weights(xi)
        o_ref[b] = xi.astype(o_ref.dtype)   # lane-dense bf16 store


# ------------------------------ wrapper ------------------------------

def _vmem_capacity_bytes():
    try:
        return int(pltpu.get_tpu_info().vmem_capacity_bytes)
    except Exception:
        return 64 * 1024 * 1024             # v7x per-TC VMEM (worst case)


def fusion_pallas(t_nchw, f_nchw, packed_params, mode=0):
    """t, f: (B, C, H, W) float32.  packed_params: from pack_params()."""
    B, C, H, W = t_nchw.shape
    HW = H * W
    wa, wb, bias = packed_params
    inter = wa.shape[0] // 2
    assert wa.shape == (2 * inter, C) and wb.shape == (C, 2 * inter)
    assert C % 8 == 0 and HW % 128 == 0, "channels/pixels must tile (8,128)"

    io_dtype = jnp.bfloat16
    io_itemsize = 2
    # NCHW -> (B, C, HW): pure reshape, plus bf16 cast to halve HBM traffic.
    t_r = t_nchw.reshape(B, C, HW).astype(io_dtype)
    f_r = f_nchw.reshape(B, C, HW).astype(io_dtype)

    # ---- batch block size Bb (generation-aware VMEM budget) ----
    # Per-step data footprint: (t, f, out) x 2 pipeline buffers x block.
    bytes_per_b = 3 * 2 * C * HW * io_itemsize
    vmem_cap = _vmem_capacity_bytes()
    data_budget = min(int(vmem_cap * 0.4), 40 * 1024 * 1024)
    max_bb = max(1, data_budget // bytes_per_b)
    max_bb = min(max_bb, 32)                # keep the unrolled in-kernel loop small
    if B >= 2:                              # keep >= 2 grid steps so the "parallel"
        max_bb = min(max_bb, max(1, B // 2))  # axis can use both v7x TensorCores
    # largest Bb <= max_bb that divides B (avoids ragged trailing blocks)
    bb = next(d for d in range(min(max_bb, B), 0, -1) if B % d == 0)
    grid_b = B // bb

    vmem_limit = max(32 * 1024 * 1024, bb * bytes_per_b + (8 << 20))
    vmem_limit = min(vmem_limit, vmem_cap - (8 << 20))

    px_spec = pl.BlockSpec((bb, C, HW), lambda b: (b, 0, 0))
    res_spec = lambda shp: pl.BlockSpec(shp, lambda b: (0, 0))  # grid-resident params

    out = pl.pallas_call(
        functools.partial(_fusion_kernel, inter=inter, mode=mode, bb=bb),
        out_shape=jax.ShapeDtypeStruct((B, C, HW), io_dtype),
        grid_spec=pltpu.PrefetchScalarGridSpec(
            num_scalar_prefetch=0,
            grid=(grid_b,),
            in_specs=[
                px_spec, px_spec,
                res_spec(wa.shape), res_spec(wb.shape), res_spec(bias.shape),
            ],
            out_specs=px_spec,
        ),
        compiler_params=pltpu.CompilerParams(
            dimension_semantics=("parallel",),
            vmem_limit_bytes=int(vmem_limit)),
    )(t_r, f_r, wa, wb, bias)

    # Cast back to f32 to match the PyTorch module's output dtype.  In a real
    # pipeline the consumer would keep bf16 and avoid this extra pass.
    return out.reshape(B, C, H, W).astype(jnp.float32)


# ------------------------ parameter construction ------------------------

def _fold_bn(w, b, gamma, beta, mean, var, eps=1e-5):
    """Fold inference-mode BatchNorm into a (in, out) matmul weight + bias."""
    scale = gamma / jnp.sqrt(var + eps)
    return w * scale[None, :], (b - mean) * scale + beta


def make_params(key, in_channels, out_channels, ratio, limitation=4):
    """Returns the 8 BN-folded params in (in, out) matmul convention."""
    inter = max(int(out_channels // ratio), limitation)
    keys = iter(jax.random.split(key, 24))
    nk = lambda: next(keys)

    def bn_params(c):
        gamma = 0.5 + jax.random.uniform(nk(), (c,), dtype=jnp.float32)
        beta = 0.1 * jax.random.normal(nk(), (c,), dtype=jnp.float32)
        mean = 0.1 * jax.random.normal(nk(), (c,), dtype=jnp.float32)
        var = 0.5 + jax.random.uniform(nk(), (c,), dtype=jnp.float32)
        return gamma, beta, mean, var

    def branch():
        w_a = 0.2 * jax.random.normal(nk(), (in_channels, inter), dtype=jnp.float32)
        b_a = 0.1 * jax.random.normal(nk(), (inter,), dtype=jnp.float32)
        bn_a = bn_params(inter)
        w_b = 0.2 * jax.random.normal(nk(), (inter, out_channels), dtype=jnp.float32)
        b_b = 0.1 * jax.random.normal(nk(), (out_channels,), dtype=jnp.float32)
        bn_b = bn_params(out_channels)
        wa, ba = _fold_bn(w_a, b_a, *bn_a)
        wb, bb = _fold_bn(w_b, b_b, *bn_b)
        return wa, ba, wb, bb

    w1, b1, w2, b2 = branch()          # local_att  (BN folded, inference mode)
    wg1, bg1, wg2, bg2 = branch()      # global_att (BN folded, inference mode)
    return (w1, b1, w2, b2, wg1, bg1, wg2, bg2)


def pack_params(params):
    """Pack the 8 params into 3 kernel operands for the (C, HW) layout."""
    w1, b1, w2, b2, wg1, bg1, wg2, bg2 = params
    C, I = w1.shape
    wa = jnp.concatenate([w1.T, wg1.T], axis=0)                    # (2I, C)
    wb = jnp.concatenate([w2.T, wg2.T], axis=1)                    # (C, 2I)
    R = max(C, I)                        # pad target (handles inter > C too)
    pad = lambda v: jnp.pad(v.reshape(-1), (0, R - v.size))
    # columns: [b1 | bg1 | b2+bg2]  (second-layer biases pre-summed)
    bias = jnp.stack([pad(b1), pad(bg1), pad(b2 + bg2)], axis=1)   # (R, 3)
    return wa, wb, bias


# ------------------------ plain-JAX reference ------------------------

def fusion_reference(t, f, params, mode=0):
    (w1, b1, w2, b2, wg1, bg1, wg2, bg2) = params

    def att(x):  # x: (B, C, H, W)
        h1 = jnp.einsum('bchw,ci->bihw', x, w1) + b1.reshape(1, -1, 1, 1)
        h1 = jnp.maximum(h1, 0.0)
        xl = jnp.einsum('bihw,io->bohw', h1, w2) + b2.reshape(1, -1, 1, 1)
        p = jnp.mean(x, axis=(2, 3))                               # (B, C)
        g1 = jnp.maximum(p @ wg1 + bg1, 0.0)
        xg = (g1 @ wg2 + bg2)[:, :, None, None]
        return jax.nn.softmax(xl + xg, axis=1)

    xa = t + f
    wei = att(xa)
    xi = t * wei + f * (1.0 - wei)
    if mode != 0:
        wei2 = att(xi)
        xi = t * wei2 + f * (1.0 - wei2)
    return xi


if __name__ == "__main__":
    B, C, H, W = 2, 16, 16, 16        # in_channels == out_channels == 16
    ratio, limitation = 4, 4          # inter_channels = max(16//4, 4) = 4

    key = jax.random.PRNGKey(0)
    k_t, k_f, k_p = jax.random.split(key, 3)
    t = jax.random.normal(k_t, (B, C, H, W), dtype=jnp.float32)
    f = jax.random.normal(k_f, (B, C, H, W), dtype=jnp.float32)
    params = make_params(k_p, C, C, ratio, limitation)
    packed = pack_params(params)

    # The kernel rounds t/f to bf16 at the HBM boundary; evaluate the reference
    # on the same bf16-rounded inputs so the comparison isolates kernel math.
    t_q = t.astype(jnp.bfloat16).astype(jnp.float32)
    f_q = f.astype(jnp.bfloat16).astype(jnp.float32)

    for mode in (0, 1):               # exercise both the single- and two-pass paths
        out = fusion_pallas(t, f, packed, mode=mode)
        jax.block_until_ready(out)
        ref = fusion_reference(t_q, f_q, params, mode=mode)
        assert out.shape == (B, C, H, W)
        err = float(jnp.max(jnp.abs(out - ref)))
        # Tolerance covers the bf16 output store (~0.4% relative).
        assert jnp.allclose(out, ref, atol=1e-2, rtol=2e-2), (mode, err)

    print("KERNEL_OK")
</pallas_src>

<mosaic_0001>
module attributes {stable_mosaic.version = 11 : i64} {
  func.func @_fusion_kernel(%arg0: i32, %arg1: memref<1x16x256xbf16, #tpu.memory_space<vmem>>, %arg2: memref<1x16x256xbf16, #tpu.memory_space<vmem>>, %arg3: memref<8x16xf32, #tpu.memory_space<vmem>>, %arg4: memref<16x8xf32, #tpu.memory_space<vmem>>, %arg5: memref<16x3xf32, #tpu.memory_space<vmem>>, %arg6: memref<1x16x256xbf16, #tpu.memory_space<vmem>>) attributes {dimension_semantics = [#tpu.dimension_semantics<parallel>], iteration_bounds = array<i64: 2>, scalar_prefetch = 0 : i64, scratch_operands = 0 : i64, tpu.core_type = #tpu.core_type<tc>, window_params = [{transform_indices = @transform_0, window_bounds = array<i64: 1, 16, 256>}, {transform_indices = @transform_1, window_bounds = array<i64: 1, 16, 256>}, {pipeline_mode = #tpu.pipeline_mode<synchronous>, transform_indices = @transform_2, window_bounds = array<i64: 8, 16>}, {pipeline_mode = #tpu.pipeline_mode<synchronous>, transform_indices = @transform_3, window_bounds = array<i64: 16, 8>}, {pipeline_mode = #tpu.pipeline_mode<synchronous>, transform_indices = @transform_4, window_bounds = array<i64: 16, 3>}, {transform_indices = @transform_5, window_bounds = array<i64: 1, 16, 256>}]} {
    %c0 = arith.constant 0 : index
    %c0_0 = arith.constant 0 : index
    %0 = vector.load %arg3[%c0, %c0_0] : memref<8x16xf32, #tpu.memory_space<vmem>>, vector<8x16xf32>
    %c0_1 = arith.constant 0 : index
    %c0_2 = arith.constant 0 : index
    %1 = vector.load %arg4[%c0_1, %c0_2] : memref<16x8xf32, #tpu.memory_space<vmem>>, vector<16x8xf32>
    %c0_3 = arith.constant 0 : index
    %c0_4 = arith.constant 0 : index
    %2 = vector.load %arg5[%c0_3, %c0_4] : memref<16x3xf32, #tpu.memory_space<vmem>>, vector<16x3xf32>
    %3 = vector.extract_strided_slice %2 {offsets = [0, 0], sizes = [4, 1], strides = [1, 1]} : vector<16x3xf32> to vector<4x1xf32>
    %4 = vector.extract_strided_slice %2 {offsets = [0, 1], sizes = [4, 1], strides = [1, 1]} : vector<16x3xf32> to vector<4x1xf32>
    %5 = vector.extract_strided_slice %2 {offsets = [0, 2], sizes = [16, 1], strides = [1, 1]} : vector<16x3xf32> to vector<16x1xf32>
    %c0_5 = arith.constant 0 : index
    %c0_6 = arith.constant 0 : index
    %c0_7 = arith.constant 0 : index
    %6 = vector.load %arg1[%c0_5, %c0_6, %c0_7] : memref<1x16x256xbf16, #tpu.memory_space<vmem>>, vector<1x16x256xbf16>
    %7 = vector.shape_cast %6 : vector<1x16x256xbf16> to vector<16x256xbf16>
    %8 = arith.extf %7 : vector<16x256xbf16> to vector<16x256xf32>
    %c0_8 = arith.constant 0 : index
    %c0_9 = arith.constant 0 : index
    %c0_10 = arith.constant 0 : index
    %9 = vector.load %arg2[%c0_8, %c0_9, %c0_10] : memref<1x16x256xbf16, #tpu.memory_space<vmem>>, vector<1x16x256xbf16>
    %10 = vector.shape_cast %9 : vector<1x16x256xbf16> to vector<16x256xbf16>
    %11 = arith.extf %10 : vector<16x256xbf16> to vector<16x256xf32>
    %12 = arith.subf %8, %11 : vector<16x256xf32>
    %13 = arith.addf %8, %11 : vector<16x256xf32>
    %cst = arith.constant dense<0.000000e+00> : vector<8x256xf32>
    %14 = tpu.matmul %0, %13, %cst {dimension_numbers = #tpu.dot_dimension_numbers<[1], [0], [0], [1], [0, 0, 1, 1], [], []>} : vector<8x16xf32>, vector<16x256xf32>, vector<8x256xf32> -> vector<8x256xf32>
    %15 = vector.extract_strided_slice %14 {offsets = [0, 0], sizes = [4, 256], strides = [1, 1]} : vector<8x256xf32> to vector<4x256xf32>
    %16 = vector.broadcast %3 : vector<4x1xf32> to vector<4x256xf32>
    %17 = arith.addf %15, %16 : vector<4x256xf32>
    %cst_11 = arith.constant 0.000000e+00 : f32
    %18 = vector.broadcast %cst_11 : f32 to vector<4x256xf32>
    %19 = arith.maximumf %17, %18 : vector<4x256xf32>
    %20 = vector.extract_strided_slice %14 {offsets = [4, 0], sizes = [4, 256], strides = [1, 1]} : vector<8x256xf32> to vector<4x256xf32>
    %cst_12 = arith.constant dense<0.000000e+00> : vector<4xf32>
    %21 = vector.multi_reduction <add>, %20, %cst_12 [1] : vector<4x256xf32> to vector<4xf32>
    %22 = vector.shape_cast %21 : vector<4xf32> to vector<4x1xf32>
    %cst_13 = arith.constant 3.906250e-03 : f32
    %23 = vector.broadcast %cst_13 : f32 to vector<4x1xf32>
    %24 = arith.mulf %22, %23 : vector<4x1xf32>
    %25 = arith.addf %24, %4 : vector<4x1xf32>
    %cst_14 = arith.constant 0.000000e+00 : f32
    %26 = vector.broadcast %cst_14 : f32 to vector<4x1xf32>
    %27 = arith.maximumf %25, %26 : vector<4x1xf32>
    %28 = vector.shape_cast %27 : vector<4x1xf32> to vector<4x1xf32>
    %29 = vector.broadcast %28 : vector<4x1xf32> to vector<4x256xf32>
    %30 = tpu.concatenate %19, %29 in 0 : vector<4x256xf32>, vector<4x256xf32> -> vector<8x256xf32>
    %cst_15 = arith.constant dense<0.000000e+00> : vector<16x256xf32>
    %31 = tpu.matmul %1, %30, %cst_15 {dimension_numbers = #tpu.dot_dimension_numbers<[1], [0], [0], [1], [0, 0, 1, 1], [], []>} : vector<16x8xf32>, vector<8x256xf32>, vector<16x256xf32> -> vector<16x256xf32>
    %32 = vector.broadcast %5 : vector<16x1xf32> to vector<16x256xf32>
    %33 = arith.addf %31, %32 : vector<16x256xf32>
    %cst_16 = arith.constant dense<0xFF800000> : vector<256xf32>
    %34 = vector.multi_reduction <maximumf>, %33, %cst_16 [0] : vector<16x256xf32> to vector<256xf32>
    %35 = vector.shape_cast %34 : vector<256xf32> to vector<1x256xf32>
    %36 = vector.broadcast %35 : vector<1x256xf32> to vector<16x256xf32>
    %37 = arith.subf %33, %36 : vector<16x256xf32>
    %38 = math.exp %37 : vector<16x256xf32>
    %cst_17 = arith.constant dense<0.000000e+00> : vector<256xf32>
    %39 = vector.multi_reduction <add>, %38, %cst_17 [0] : vector<16x256xf32> to vector<256xf32>
    %40 = vector.shape_cast %39 : vector<256xf32> to vector<1x256xf32>
    %41 = vector.broadcast %40 : vector<1x256xf32> to vector<16x256xf32>
    %42 = arith.divf %38, %41 : vector<16x256xf32>
    %43 = arith.mulf %12, %42 : vector<16x256xf32>
    %44 = arith.addf %11, %43 : vector<16x256xf32>
    %45 = arith.truncf %44 : vector<16x256xf32> to vector<16x256xbf16>
    %c0_18 = arith.constant 0 : index
    %c0_19 = arith.constant 0 : index
    %c0_20 = arith.constant 0 : index
    %46 = vector.load %arg6[%c0_18, %c0_19, %c0_20] : memref<1x16x256xbf16, #tpu.memory_space<vmem>>, vector<1x16x256xbf16>
    %47 = vector.shape_cast %46 : vector<1x16x256xbf16> to vector<16x256xbf16>
    %48 = vector.shape_cast %45 : vector<16x256xbf16> to vector<1x16x256xbf16>
    tpu.vector_store %arg6[%c0_18, %c0_19, %c0_20], %48 {strides = array<i32>} : memref<1x16x256xbf16, #tpu.memory_space<vmem>>, vector<1x16x256xbf16>,
    return
  }
  func.func @transform_0(%arg0: i32) -> (i32, i32, i32) {
    %c0_i32 = arith.constant 0 : i32
    %c0_i32_0 = arith.constant 0 : i32
    %c0_i32_1 = arith.constant 0 : i32
    return %arg0, %c0_i32, %c0_i32_0 : i32, i32, i32
  }
  func.func @transform_1(%arg0: i32) -> (i32, i32, i32) {
    %c0_i32 = arith.constant 0 : i32
    %c0_i32_0 = arith.constant 0 : i32
    %c0_i32_1 = arith.constant 0 : i32
    return %arg0, %c0_i32, %c0_i32_0 : i32, i32, i32
  }
  func.func @transform_2(%arg0: i32) -> (i32, i32) {
    %c0_i32 = arith.constant 0 : i32
    %c0_i32_0 = arith.constant 0 : i32
    %c0_i32_1 = arith.constant 0 : i32
    return %c0_i32, %c0_i32_0 : i32, i32
  }
  func.func @transform_3(%arg0: i32) -> (i32, i32) {
    %c0_i32 = arith.constant 0 : i32
    %c0_i32_0 = arith.constant 0 : i32
    %c0_i32_1 = arith.constant 0 : i32
    return %c0_i32, %c0_i32_0 : i32, i32
  }
  func.func @transform_4(%arg0: i32) -> (i32, i32) {
    %c0_i32 = arith.constant 0 : i32
    %c0_i32_0 = arith.constant 0 : i32
    %c0_i32_1 = arith.constant 0 : i32
    return %c0_i32, %c0_i32_0 : i32, i32
  }
  func.func @transform_5(%arg0: i32) -> (i32, i32, i32) {
    %c0_i32 = arith.constant 0 : i32
    %c0_i32_0 = arith.constant 0 : i32
    %c0_i32_1 = arith.constant 0 : i32
    return %arg0, %c0_i32, %c0_i32_0 : i32, i32, i32
  }
}

</mosaic_0001>

<llo_original>
// kernel: tpu_custom_call.1
$region0: #{tpu_custom_call.1}
  #allocation0 [shape = 'u32[]', space=smem, size = 0x4, offset = 0x4, fixed_abs, tag = 'smem constant byte address 0x4 - core index']
  #allocation1 [shape = 'u32[144,128]{1,0:T(1,128)}', space=vmem, size = 0x12000, scoped, tag = 'internal scratch']
  %s0 = inlined_call_operand.vmem [shape: bf16[2,16,256], index: 0, kind: input, shape index: {}]
  %s1 = inlined_call_operand.hbm [shape: bf16[2,16,256], index: 1, kind: input, shape index: {}]
  %s2 = inlined_call_operand.vmem [shape: f32[8,16], index: 2, kind: input, shape index: {}]
  %s3 = inlined_call_operand.vmem [shape: f32[16,8], index: 3, kind: input, shape index: {}]
  %s4 = inlined_call_operand.vmem [shape: f32[16,3], index: 4, kind: input, shape index: {}]
  %s5 = inlined_call_operand.hbm [shape: bf16[2,16,256], index: 5, kind: output, shape index: {}]
  %s6 = sld [smem:[#allocation0]]
  $region57: #{tpu_custom_call.1} parent=0
    _
  %s8 = ssub.s32 1, %s6
  %s9 = scalar_select 0, %s8, %s6
  $region1: #{tpu_custom_call.1} parent=0
    #allocation2 [shape = 'u8[16384]{0}', space=vmem, size = 0x4000, scoped, tag = 'input window, operand 1']
    #allocation3 [shape = 's32[2]{0}', space=sflag, size = 0x8, scoped, tag = 'scoped memory for tpu_custom_call.1']
    #allocation4 [shape = 's32[2]{0}', space=sflag, size = 0x8, scoped, tag = 'scoped memory for tpu_custom_call.1']
    #allocation5 [shape = 'u8[16384]{0}', space=vmem, size = 0x4000, scoped, tag = 'output window, operand 0']
    %10 = vsyncpa [#allocation3], 0
    %s11 = scalar_lea.sflag [#allocation3], 1
    %12 = vsyncpa %s11, 0
    %13 = vsyncpa [#allocation4], 0
    %s14 = scalar_lea.sflag [#allocation4], 1
    %15 = vsyncpa %s14, 0
    loop: start=0, step=1, limit=4
    $region2: #{tpu_custom_call.1} parent=1 // loop_pre_header
      _
    $region3: #{tpu_custom_call.1} parent=1 // loop_header
      %s17 = sphi 0, %s21
      %p18 = scmp.ge.s32.totalorder %s17, 4
      %s27 = sphi 0, %s29
      %s30 = sphi 0, %s27
      %s31 = sphi 0, %s30
      %s47 = sphi 0, %s31
      %s53 = sphi 0, %s55
      %s56 = sphi 0, %s53
      %s57 = sphi 0, %s56
      %s73 = sphi 0, %s57
      %s77 = sphi 0, %s77
      %s79 = sphi 0, %s77
      %s80 = sphi 0, %s79
      %s94 = sphi 0, %s80
      %s98 = sphi 0, %s98
      %s100 = sphi 0, %s98
      %s101 = sphi 0, %s100
      %s115 = sphi 0, %s101
      %s119 = sphi 0, %s119
      %s121 = sphi 0, %s119
      %s122 = sphi 0, %s121
      %s136 = sphi 0, %s122
      %s142 = sphi 0, %s144
      %s145 = sphi 0, %s142
      %s146 = sphi 0, %s145
      %s162 = sphi 0, %s146
    $region4: #{tpu_custom_call.1} parent=1 // loop_header_branch
      %20 = sbr.rel (%p18) target = $region8
    $region5: #{tpu_custom_call.1} parent=1 // loop_body
      %s22 = ssub.s32 %s17, 1
      %s23 = ssub.s32 %s17, 2
      %s24 = sadd.s32 %s17, 1
      %s25 = ssub.s32 %s17, %s24
      %p26 = scmp.eq.s32.totalorder %s25, 0
      %s28 = sadd.s32 %s27, 1
      %s29 = scalar_select %p26, %s27, %s28
      %p32 = pneg %p26
      %p33 = scmp.eq.s32.totalorder %s17, 1
      %p34 = por %p32, %p33
      %p35 = scmp.ne.s32.totalorder %s27, %s30
      %p36 = scmp.eq.s32.totalorder %s17, 0
      %p37 = por %p35, %p36
      %p38 = scmp.ne.s32.totalorder %s27, %s30
      %p39 = scmp.eq.s32.totalorder %s22, 1
      %p40 = por %p38, %p39
      %p41 = scmp.ne.s32.totalorder %s30, %s31
      %p42 = scmp.eq.s32.totalorder %s22, 0
      %p43 = por %p41, %p42
      %p44 = scmp.ne.s32.totalorder %s30, %s31
      %p45 = scmp.eq.s32.totalorder %s23, 1
      %p46 = por %p44, %p45
      %p48 = scmp.ne.s32.totalorder %s31, %s47
      %p49 = scmp.eq.s32.totalorder %s23, 0
      %p50 = por %p48, %p49
      %s51 = ssub.s32 %s17, %s24
      %p52 = scmp.eq.s32.totalorder %s51, 0
      %s54 = sadd.s32 %s53, 1
      %s55 = scalar_select %p52, %s53, %s54
      %p58 = pneg %p52
      %p59 = scmp.eq.s32.totalorder %s17, 1
      %p60 = por %p58, %p59
      %p61 = scmp.ne.s32.totalorder %s53, %s56
      %p62 = scmp.eq.s32.totalorder %s17, 0
      %p63 = por %p61, %p62
      %p64 = scmp.ne.s32.totalorder %s53, %s56
      %p65 = scmp.eq.s32.totalorder %s22, 1
      %p66 = por %p64, %p65
      %p67 = scmp.ne.s32.totalorder %s56, %s57
      %p68 = scmp.eq.s32.totalorder %s22, 0
      %p69 = por %p67, %p68
      %p70 = scmp.ne.s32.totalorder %s56, %s57
      %p71 = scmp.eq.s32.totalorder %s23, 1
      %p72 = por %p70, %p71
      %p74 = scmp.ne.s32.totalorder %s57, %s73
      %p75 = scmp.eq.s32.totalorder %s23, 0
      %p76 = por %p74, %p75
      %s78 = sadd.s32 %s77, 1
      %p81 = scmp.eq.s32.totalorder %s17, 1
      %p82 = scmp.ne.s32.totalorder %s77, %s79
      %p83 = scmp.eq.s32.totalorder %s17, 0
      %p84 = por %p82, %p83
      %p85 = scmp.ne.s32.totalorder %s77, %s79
      %p86 = scmp.eq.s32.totalorder %s22, 1
      %p87 = por %p85, %p86
      %p88 = scmp.ne.s32.totalorder %s79, %s80
      %p89 = scmp.eq.s32.totalorder %s22, 0
      %p90 = por %p88, %p89
      %p91 = scmp.ne.s32.totalorder %s79, %s80
      %p92 = scmp.eq.s32.totalorder %s23, 1
      %p93 = por %p91, %p92
      %p95 = scmp.ne.s32.totalorder %s80, %s94
      %p96 = scmp.eq.s32.totalorder %s23, 0
      %p97 = por %p95, %p96
      %s99 = sadd.s32 %s98, 1
      %p102 = scmp.eq.s32.totalorder %s17, 1
      %p103 = scmp.ne.s32.totalorder %s98, %s100
      %p104 = scmp.eq.s32.totalorder %s17, 0
      %p105 = por %p103, %p104
      %p106 = scmp.ne.s32.totalorder %s98, %s100
      %p107 = scmp.eq.s32.totalorder %s22, 1
      %p108 = por %p106, %p107
      %p109 = scmp.ne.s32.totalorder %s100, %s101
      %p110 = scmp.eq.s32.totalorder %s22, 0
      %p111 = por %p109, %p110
      %p112 = scmp.ne.s32.totalorder %s100, %s101
      %p113 = scmp.eq.s32.totalorder %s23, 1
      %p114 = por %p112, %p113
      %p116 = scmp.ne.s32.totalorder %s101, %s115
      %p117 = scmp.eq.s32.totalorder %s23, 0
      %p118 = por %p116, %p117
      %s120 = sadd.s32 %s119, 1
      %p123 = scmp.eq.s32.totalorder %s17, 1
      %p124 = scmp.ne.s32.totalorder %s119, %s121
      %p125 = scmp.eq.s32.totalorder %s17, 0
      %p126 = por %p124, %p125
      %p127 = scmp.ne.s32.totalorder %s119, %s121
      %p128 = scmp.eq.s32.totalorder %s22, 1
      %p129 = por %p127, %p128
      %p130 = scmp.ne.s32.totalorder %s121, %s122
      %p131 = scmp.eq.s32.totalorder %s22, 0
      %p132 = por %p130, %p131
      %p133 = scmp.ne.s32.totalorder %s121, %s122
      %p134 = scmp.eq.s32.totalorder %s23, 1
      %p135 = por %p133, %p134
      %p137 = scmp.ne.s32.totalorder %s122, %s136
      %p138 = scmp.eq.s32.totalorder %s23, 0
      %p139 = por %p137, %p138
      %s140 = ssub.s32 %s17, %s24
      %p141 = scmp.eq.s32.totalorder %s140, 0
      %s143 = sadd.s32 %s142, 1
      %s144 = scalar_select %p141, %s142, %s143
      %p147 = pneg %p141
      %p148 = scmp.eq.s32.totalorder %s17, 1
      %p149 = por %p147, %p148
      %p150 = scmp.ne.s32.totalorder %s142, %s145
      %p151 = scmp.eq.s32.totalorder %s17, 0
      %p152 = por %p150, %p151
      %p153 = scmp.ne.s32.totalorder %s142, %s145
      %p154 = scmp.eq.s32.totalorder %s22, 1
      %p155 = por %p153, %p154
      %p156 = scmp.ne.s32.totalorder %s145, %s146
      %p157 = scmp.eq.s32.totalorder %s22, 0
      %p158 = por %p156, %p157
      %p159 = scmp.ne.s32.totalorder %s145, %s146
      %p160 = scmp.eq.s32.totalorder %s23, 1
      %p161 = por %p159, %p160
      %p163 = scmp.ne.s32.totalorder %s146, %s162
      %p164 = scmp.eq.s32.totalorder %s23, 0
      %p165 = por %p163, %p164
      %p166 = scmp.le.s32.totalorder 1, %s17
      %p167 = scmp.lt.s32.totalorder %s17, 3
      %p168 = pnand %p166, %p167
      %p169 = pneg %p168
      // Predicated region
      $region9: #{tpu_custom_call.1} parent=5 // pred_check
        _
      $region10: #{tpu_custom_call.1} parent=5 // pred_check_branch
        %171 = sbr.rel (%p168) target = $region12
      $region11: #{tpu_custom_call.1} parent=5 // pred_region
        %s172 = ssub.s32 %s17, 1
        // Predicated region
        $region13: #{tpu_custom_call.1} parent=11 // pred_check
          %p173 = pneg %p90
        $region14: #{tpu_custom_call.1} parent=11 // pred_check_branch
          %175 = sbr.rel (%p173) target = $region16
        $region15: #{tpu_custom_call.1} parent=11 // pred_region
          _
        $region16: #{tpu_custom_call.1} parent=11 // pred_fallthru
          _
        // Predicated region
        $region17: #{tpu_custom_call.1} parent=11 // pred_check
          %p176 = pneg %p111
        $region18: #{tpu_custom_call.1} parent=11 // pred_check_branch
          %178 = sbr.rel (%p176) target = $region20
        $region19: #{tpu_custom_call.1} parent=11 // pred_region
          _
        $region20: #{tpu_custom_call.1} parent=11 // pred_fallthru
          _
        // Predicated region
        $region21: #{tpu_custom_call.1} parent=11 // pred_check
          %p179 = pneg %p132
        $region22: #{tpu_custom_call.1} parent=11 // pred_check_branch
          %181 = sbr.rel (%p179) target = $region24
        $region23: #{tpu_custom_call.1} parent=11 // pred_region
          _
        $region24: #{tpu_custom_call.1} parent=11 // pred_fallthru
          _
      $region12: #{tpu_custom_call.1} parent=5 // pred_fallthru
        _
      %p182 = scmp.lt.s32.totalorder %s17, 2
      // Predicated region
      $region25: #{tpu_custom_call.1} parent=5 // pred_check
        %p183 = pneg %p182
      $region26: #{tpu_custom_call.1} parent=5 // pred_check_branch
        %185 = sbr.rel (%p183) target = $region28
      $region27: #{tpu_custom_call.1} parent=5 // pred_region
        // Predicated region
        $region29: #{tpu_custom_call.1} parent=27 // pred_check
          %p186 = pneg %p37
        $region30: #{tpu_custom_call.1} parent=27 // pred_check_branch
          %188 = sbr.rel (%p186) target = $region32
        $region31: #{tpu_custom_call.1} parent=27 // pred_region
          %p189 = scmp.lt.s32.totalorder %s17, 1
          %s190 = scalar_select %p189, %s17, 1
          %s191 = smul.addr %s190, 4
          %s192 = smul.addr %s191, 4
          %s193 = scalar_lea.vmem %s0, %s192
        $region32: #{tpu_custom_call.1} parent=27 // pred_fallthru
          _
        // Predicated region
        $region33: #{tpu_custom_call.1} parent=27 // pred_check
          %p194 = pneg %p63
        $region34: #{tpu_custom_call.1} parent=27 // pred_check_branch
          %196 = sbr.rel (%p194) target = $region36
        $region35: #{tpu_custom_call.1} parent=27 // pred_region
          %s197 = sand.u32 %s53, 1
          %s198 = scalar_lea.sflag [#allocation3], %s197
          %s199 = sand.u32 %s53, 1
          %s200 = smul.addr %s199, 16
          %s201 = scalar_lea.vmem [#allocation2], %s200
          %s203 = ssub.s32 256, 256
          %204 = vsyncadd %s198, %s203
          %s205 = smul.addr %s17, 4
          %s206 = smul.addr %s205, 64
          %s207 = scalar_lea.hbm %s1, %s206
          %s208 = sshll.u32 %s201, 4
          %s209 = int_to_ptr.vmem [resolvable:$true] %s208
          %214 = dma.hbm_to_vmem [thread:$0]  %s207, 256, %s209, %s198, 128, 128, 8
        $region36: #{tpu_custom_call.1} parent=27 // pred_fallthru
          _
      $region28: #{tpu_custom_call.1} parent=5 // pred_fallthru
        _
      %p215 = scmp.le.s32.totalorder 1, %s17
      %p216 = scmp.lt.s32.totalorder %s17, 3
      %p217 = pnand %p215, %p216
      %p218 = pneg %p217
      // Predicated region
      $region37: #{tpu_custom_call.1} parent=5 // pred_check
        _
      $region38: #{tpu_custom_call.1} parent=5 // pred_check_branch
        %220 = sbr.rel (%p217) target = $region40
      $region39: #{tpu_custom_call.1} parent=5 // pred_region
        %s221 = ssub.s32 %s17, 1
        %s222 = sand.u32 %s56, 1
        %s223 = scalar_lea.sflag [#allocation3], %s222
        %s224 = sand.u32 %s56, 1
        %s225 = smul.addr %s224, 16
        %s226 = scalar_lea.vmem [#allocation2], %s225
        // Predicated region
        $region41: #{tpu_custom_call.1} parent=39 // pred_check
          %p227 = pneg %p69
        $region42: #{tpu_custom_call.1} parent=39 // pred_check_branch
          %229 = sbr.rel (%p227) target = $region44
        $region43: #{tpu_custom_call.1} parent=39 // pred_region
          %230 = dma.done %s223, 256
        $region44: #{tpu_custom_call.1} parent=39 // pred_fallthru
          _
        %p231 = scmp.lt.s32.totalorder %s22, 1
        %s232 = scalar_select %p231, %s22, 1
        %s233 = smul.addr %s232, 4
        %s234 = smul.addr %s233, 4
        %s235 = scalar_lea.vmem %s0, %s234
        %p236 = pneg %p43
        %p237 = pneg %p40
        %s238 = sand.u32 %s56, 1
        %s239 = scalar_lea.sflag [#allocation3], %s238
        %s240 = sand.u32 %s56, 1
        %s241 = smul.addr %s240, 16
        %s242 = scalar_lea.vmem [#allocation2], %s241
        %p243 = pneg %p69
        %p244 = pneg %p66
        %p245 = pneg %p90
        %p246 = pneg %p87
        %p247 = pneg %p111
        %p248 = pneg %p108
        %p249 = pneg %p132
        %p250 = pneg %p129
        %p251 = pneg %p158
        %p252 = pneg %p155
        %s253 = sand.u32 %s145, 1
        %s254 = scalar_lea.sflag [#allocation4], %s253
        %s255 = sand.u32 %s145, 1
        %s256 = smul.addr %s255, 16
        %s257 = scalar_lea.vmem [#allocation5], %s256
        %p258 = scmp.lt.s32.totalorder %s22, 1
        %s259 = scalar_select %p258, %s22, 1
        %s260 = smul.addr %s259, 4
        %s261 = smul.addr %s260, 4
        %s262 = scalar_lea.vmem %s0, %s261
        %v263 = vld [vmem:[%s2] sm:$0xff]
        %v264 = vld [vmem:[%s3] sm:$0xff]
        %v265 = vld [vmem:[%s3 + $0x8] sm:$0xff]
        %v266 = vld [vmem:[%s4] sm:$0xff]
        %v267 = vld [vmem:[%s4 + $0x8] sm:$0xff]
        %v268 = vld [vmem:[%s262] sm:$0xff]
        %v269 = vld [vmem:[%s262 + $0x8] sm:$0xff]
        %v270 = vunpack.c.l.bf16 %v268
        %v271 = vunpack.c.h.bf16 %v268
        %v272 = vunpack.c.l.bf16 %v269
        %v273 = vunpack.c.h.bf16 %v269
        %v274 = vld [vmem:[%s226] sm:$0xff]
        %v275 = vld [vmem:[%s226 + $0x8] sm:$0xff]
        %v276 = vunpack.c.l.bf16 %v274
        %v277 = vunpack.c.h.bf16 %v274
        %v278 = vunpack.c.l.bf16 %v275
        %v279 = vunpack.c.h.bf16 %v275
        %v280 = vsub.f32 %v270, %v276
        %v281 = vsub.f32 %v271, %v277
        %v282 = vsub.f32 %v272, %v278
        %v283 = vsub.f32 %v273, %v279
        %v284 = vadd.f32 %v270, %v276
        %v285 = vadd.f32 %v271, %v277
        %v286 = vadd.f32 %v272, %v278
        %v287 = vadd.f32 %v273, %v279
        %vm288 = vcmask 130048
        %v290 = vsel %vm288, %v263, 0
        %292 = vmatprep.subr.mxu0 %v285
        %293 = vmatpush1.msra.mxu0 %v284
        %294 = vmatprep.subr.mxu0 %v287
        %295 = vmatpush1.msra.mxu0 %v286
        %296 = vmatprep.subr.mxu0 0.0
        %297 = vmatpush1.msra.mxu0 0.0
        %298 = vmatprep.subr.mxu0 0.0
        %299 = vmatpush1.msra.mxu0 0.0
        %300 = vmatprep.subr.mxu0 0.0
        %301 = vmatpush1.msra.mxu0 0.0
        %302 = vmatprep.subr.mxu0 0.0
        %303 = vmatpush1.msra.mxu0 0.0
        %304 = vmatprep.subr.mxu0 0.0
        %305 = vmatpush1.msra.mxu0 0.0
        %306 = vmatprep.subr.mxu0 0.0
        %307 = vmatpush1.msra.mxu0 0.0
        %308 = vmatprep.subr.mxu0 0.0
        %309 = vmatpush1.msra.mxu0 0.0
        %310 = vmatprep.subr.mxu0 0.0
        %311 = vmatpush1.msra.mxu0 0.0
        %312 = vmatprep.subr.mxu0 0.0
        %313 = vmatpush1.msra.mxu0 0.0
        %314 = vmatprep.subr.mxu0 0.0
        %315 = vmatpush1.msra.mxu0 0.0
        %316 = vmatprep.subr.mxu0 0.0
        %317 = vmatpush1.msra.mxu0 0.0
        %318 = vmatprep.subr.mxu0 0.0
        %319 = vmatpush1.msra.mxu0 0.0
        %320 = vmatprep.subr.mxu0 0.0
        %321 = vmatpush1.msra.mxu0 0.0
        %322 = vmatprep.subr.mxu0 0.0
        %323 = vmatpush1.msra.mxu0 0.0
        %324 = vmatprep.subr.mxu0 0.0
        %325 = vmatpush1.msra.mxu0 0.0
        %326 = vmatprep.subr.mxu0 0.0
        %327 = vmatpush1.msra.mxu0 0.0
        %328 = vmatprep.subr.mxu0 0.0
        %329 = vmatpush1.msra.mxu0 0.0
        %330 = vmatprep.subr.mxu0 0.0
        %331 = vmatpush1.msra.mxu0 0.0
        %332 = vmatprep.subr.mxu0 0.0
        %333 = vmatpush1.msra.mxu0 0.0
        %334 = vmatprep.subr.mxu0 0.0
        %335 = vmatpush1.msra.mxu0 0.0
        %336 = vmatprep.subr.mxu0 0.0
        %337 = vmatpush1.msra.mxu0 0.0
        %338 = vmatprep.subr.mxu0 0.0
        %339 = vmatpush1.msra.mxu0 0.0
        %340 = vmatprep.subr.mxu0 0.0
        %341 = vmatpush1.msra.mxu0 0.0
        %342 = vmatprep.subr.mxu0 0.0
        %343 = vmatpush1.msra.mxu0 0.0
        %344 = vmatprep.subr.mxu0 0.0
        %345 = vmatpush1.msra.mxu0 0.0
        %346 = vmatprep.subr.mxu0 0.0
        %347 = vmatpush1.msra.mxu0 0.0
        %348 = vmatprep.subr.mxu0 0.0
        %349 = vmatpush1.msra.mxu0 0.0
        %350 = vmatprep.subr.mxu0 0.0
        %351 = vmatpush1.msra.mxu0 0.0
        %352 = vmatprep.subr.mxu0 0.0
        %353 = vmatpush1.msra.mxu0 0.0
        %354 = vmatprep.subr.mxu0 0.0
        %355 = vmatpush1.msra.mxu0 0.0
        %356 = vmatprep.mubr.f32.mxu0 0.0
        %357 = vmatmul.mubr.f32.gmra.mrb[0].mxu0 %v290
        %v358 = vpop.f32.mrb[0].mxu0
        %v359 = vadd.f32 0.0, %v358
        %v360 = vpop.f32.mrb[0].mxu0
        %v361 = vadd.f32 0.0, %v360
        %362 = vdwg.mxu0
        %364 = vset.pattern.permute.xlu0 0
        %365 = vperm.xlu0 %364, %v266
        %v366 = vpop.permute.xlu0 %365
        %v368 = vadd.f32 %v359, %v366
        %v369 = vadd.f32 %v361, %v366
        %v370 = vmax.f32 %v368, 0.0
        %v371 = vmax.f32 %v369, 0.0
        %vm372 = vcmask 1047556
        %v373 = vsel %vm372, %v359, 0.0
        %v374 = vsel %vm372, %v361, 0.0
        %v375 = vadd.f32 %v373, %v374
        %376 = vadd.xlane.f32.xlu0 %v375
        %v377 = vpop.xlane.xlu0 %376
        %v378 = vmul.f32 %v377, 0.00390625
        %v379 = vrot.slane %v266, 4
        %380 = vrot.lane.b32.xlu0 %v379, 127
        %v381 = vpop.permute.xlu0 %380
        %v383 = vadd.f32 %v378, %v381
        %v384 = vmax.f32 %v383, 0.0
        %386 = vset.pattern.permute.xlu0 0
        %387 = vperm.xlu0 %386, %v384
        %v388 = vpop.permute.xlu0 %387
        %vm390 = vcmask 1043456
        %v391 = vsel %vm390, %v370, %v388
        %v392 = vsel %vm390, %v371, %v388
        %393 = vset.pattern.permute.xlu0 2
        %394 = vperm.xlu0 %393, %v266
        %v395 = vpop.permute.xlu0 %394
        %398 = vset.pattern.permute.xlu0 2
        %399 = vperm.xlu0 %398, %v267
        %v400 = vpop.permute.xlu0 %399
        %vm402 = vcmask 64512
        %v404 = vsel %vm402, %v264, 0
        %v407 = vsel %vm402, %v265, 0
        %409 = vmatprep.subr.mxu0 %v392
        %410 = vmatpush1.msra.mxu0 %v391
        %411 = vmatprep.subr.mxu0 0.0
        %412 = vmatpush1.msra.mxu0 0.0
        %413 = vmatprep.subr.mxu0 0.0
        %414 = vmatpush1.msra.mxu0 0.0
        %415 = vmatprep.subr.mxu0 0.0
        %416 = vmatpush1.msra.mxu0 0.0
        %417 = vmatprep.subr.mxu0 0.0
        %418 = vmatpush1.msra.mxu0 0.0
        %419 = vmatprep.subr.mxu0 0.0
        %420 = vmatpush1.msra.mxu0 0.0
        %421 = vmatprep.subr.mxu0 0.0
        %422 = vmatpush1.msra.mxu0 0.0
        %423 = vmatprep.subr.mxu0 0.0
        %424 = vmatpush1.msra.mxu0 0.0
        %425 = vmatprep.subr.mxu0 0.0
        %426 = vmatpush1.msra.mxu0 0.0
        %427 = vmatprep.subr.mxu0 0.0
        %428 = vmatpush1.msra.mxu0 0.0
        %429 = vmatprep.subr.mxu0 0.0
        %430 = vmatpush1.msra.mxu0 0.0
        %431 = vmatprep.subr.mxu0 0.0
        %432 = vmatpush1.msra.mxu0 0.0
        %433 = vmatprep.subr.mxu0 0.0
        %434 = vmatpush1.msra.mxu0 0.0
        %435 = vmatprep.subr.mxu0 0.0
        %436 = vmatpush1.msra.mxu0 0.0
        %437 = vmatprep.subr.mxu0 0.0
        %438 = vmatpush1.msra.mxu0 0.0
        %439 = vmatprep.subr.mxu0 0.0
        %440 = vmatpush1.msra.mxu0 0.0
        %441 = vmatprep.subr.mxu0 0.0
        %442 = vmatpush1.msra.mxu0 0.0
        %443 = vmatprep.subr.mxu0 0.0
        %444 = vmatpush1.msra.mxu0 0.0
        %445 = vmatprep.subr.mxu0 0.0
        %446 = vmatpush1.msra.mxu0 0.0
        %447 = vmatprep.subr.mxu0 0.0
        %448 = vmatpush1.msra.mxu0 0.0
        %449 = vmatprep.subr.mxu0 0.0
        %450 = vmatpush1.msra.mxu0 0.0
        %451 = vmatprep.subr.mxu0 0.0
        %452 = vmatpush1.msra.mxu0 0.0
        %453 = vmatprep.subr.mxu0 0.0
        %454 = vmatpush1.msra.mxu0 0.0
        %455 = vmatprep.subr.mxu0 0.0
        %456 = vmatpush1.msra.mxu0 0.0
        %457 = vmatprep.subr.mxu0 0.0
        %458 = vmatpush1.msra.mxu0 0.0
        %459 = vmatprep.subr.mxu0 0.0
        %460 = vmatpush1.msra.mxu0 0.0
        %461 = vmatprep.subr.mxu0 0.0
        %462 = vmatpush1.msra.mxu0 0.0
        %463 = vmatprep.subr.mxu0 0.0
        %464 = vmatpush1.msra.mxu0 0.0
        %465 = vmatprep.subr.mxu0 0.0
        %466 = vmatpush1.msra.mxu0 0.0
        %467 = vmatprep.subr.mxu0 0.0
        %468 = vmatpush1.msra.mxu0 0.0
        %469 = vmatprep.subr.mxu0 0.0
        %470 = vmatpush1.msra.mxu0 0.0
        %471 = vmatprep.subr.mxu0 0.0
        %472 = vmatpush1.msra.mxu0 0.0
        %473 = vmatprep.mubr.f32.mxu0 0.0
        %474 = vmatmul.mubr.f32.gmra.mrb[0].mxu0 %v404
        %v475 = vpop.f32.mrb[0].mxu0
        %v476 = vadd.f32 %v395, %v475
        %v477 = vpop.f32.mrb[0].mxu0
        %v478 = vadd.f32 %v395, %v477
        %479 = vmatprep.mubr.f32.mxu0 0.0
        %480 = vmatmul.mubr.f32.gmra.mrb[0].mxu0 %v407
        %v481 = vpop.f32.mrb[0].mxu0
        %v482 = vadd.f32 %v400, %v481
        %v483 = vpop.f32.mrb[0].mxu0
        %v484 = vadd.f32 %v400, %v483
        %485 = vdwg.mxu0
        %v486 = vmax.f32 %v476, %v482
        %v487 = vrot.slane %v486, 4
        %v488 = vmax.f32 %v486, %v487
        %v489 = vrot.slane %v488, 2
        %v490 = vmax.f32 %v488, %v489
        %v491 = vrot.slane %v490, 1
        %v492 = vmax.f32 %v490, %v491
        %v493 = vmax.f32 %v478, %v484
        %v494 = vrot.slane %v493, 4
        %v495 = vmax.f32 %v493, %v494
        %v496 = vrot.slane %v495, 2
        %v497 = vmax.f32 %v495, %v496
        %v498 = vrot.slane %v497, 1
        %v499 = vmax.f32 %v497, %v498
        %v500 = vsub.f32 %v476, %v492
        %v501 = vsub.f32 %v478, %v499
        %v502 = vsub.f32 %v482, %v492
        %v503 = vsub.f32 %v484, %v499
        %v504 = vmul.f32 %v500, 1.442695
        %v505 = vpow.pop %v504
        %v506 = vmul.f32 %v501, 1.442695
        %v507 = vpow.pop %v506
        %v508 = vmul.f32 %v502, 1.442695
        %v509 = vpow.pop %v508
        %v510 = vmul.f32 %v503, 1.442695
        %v511 = vpow.pop %v510
        %v512 = vadd.f32 %v505, %v509
        %v513 = vrot.slane %v512, 4
        %v514 = vadd.f32 %v512, %v513
        %v515 = vrot.slane %v514, 2
        %v516 = vadd.f32 %v514, %v515
        %v517 = vrot.slane %v516, 1
        %v518 = vadd.f32 %v516, %v517
        %v519 = vadd.f32 %v507, %v511
        %v520 = vrot.slane %v519, 4
        %v521 = vadd.f32 %v519, %v520
        %v522 = vrot.slane %v521, 2
        %v523 = vadd.f32 %v521, %v522
        %v524 = vrot.slane %v523, 1
        %v525 = vadd.f32 %v523, %v524
        %v526 = vrcp.pop %v518
        %v527 = vmul.f32 %v505, %v526
        %v528 = vrcp.pop %v525
        %v529 = vmul.f32 %v507, %v528
        %v530 = vmul.f32 %v509, %v526
        %v531 = vmul.f32 %v511, %v528
        %v532 = vmul.f32 %v280, %v527
        %v533 = vmul.f32 %v281, %v529
        %v534 = vmul.f32 %v282, %v530
        %v535 = vmul.f32 %v283, %v531
        %v536 = vadd.f32 %v276, %v532
        %v537 = vadd.f32 %v277, %v533
        %v538 = vadd.f32 %v278, %v534
        %v539 = vadd.f32 %v279, %v535
        %v540 = vpack.c.bf16 %v538, %v536
        %v541 = vpack.c.bf16 %v539, %v537
        %v544 = vunpack.c.l.b16 %v540
        %v545 = vunpack.c.l.b16 %v541
        %v546 = vunpack.c.h.b16 %v540
        %v547 = vunpack.c.h.b16 %v541
        %v548 = vpack.c.b16 %v545, %v544
        %v549 = vpack.c.b16 %v547, %v546
        %552 = vst [vmem:[%s257] sm:$0xff] %v548
        %553 = vst [vmem:[%s257 + $0x8] sm:$0xff] %v549
        %s554 = sand.u32 %s145, 1
        %s555 = scalar_lea.sflag [#allocation4], %s554
        %s556 = sand.u32 %s145, 1
        %s557 = smul.addr %s556, 16
        %s558 = scalar_lea.vmem [#allocation5], %s557
        // Predicated region
        $region45: #{tpu_custom_call.1} parent=39 // pred_check
          %p559 = pneg %p155
        $region46: #{tpu_custom_call.1} parent=39 // pred_check_branch
          %561 = sbr.rel (%p559) target = $region48
        $region47: #{tpu_custom_call.1} parent=39 // pred_region
          %s563 = ssub.s32 256, 256
          %564 = vsyncadd %s555, %s563
          %s565 = smul.addr %s22, 4
          %s566 = smul.addr %s565, 64
          %s567 = scalar_lea.hbm %s5, %s566
          %s568 = sshll.u32 %s558, 4
          %s569 = int_to_ptr.vmem [resolvable:$true] %s568
          %574 = dma.vmem_to_hbm [thread:$0]  %s569, 256, %s567, %s555, 128, 128, 8
        $region48: #{tpu_custom_call.1} parent=39 // pred_fallthru
          _
      $region40: #{tpu_custom_call.1} parent=5 // pred_fallthru
        _
      %p575 = scmp.le.s32.totalorder 2, %s17
      // Predicated region
      $region49: #{tpu_custom_call.1} parent=5 // pred_check
        %p576 = pneg %p575
      $region50: #{tpu_custom_call.1} parent=5 // pred_check_branch
        %578 = sbr.rel (%p576) target = $region52
      $region51: #{tpu_custom_call.1} parent=5 // pred_region
        %s579 = ssub.s32 %s17, 2
        // Predicated region
        $region53: #{tpu_custom_call.1} parent=51 // pred_check
          %p580 = pneg %p161
        $region54: #{tpu_custom_call.1} parent=51 // pred_check_branch
          %582 = sbr.rel (%p580) target = $region56
        $region55: #{tpu_custom_call.1} parent=51 // pred_region
          %s583 = sand.u32 %s146, 1
          %s584 = scalar_lea.sflag [#allocation4], %s583
          %s585 = sand.u32 %s146, 1
          %s586 = smul.addr %s585, 16
          %s587 = scalar_lea.vmem [#allocation5], %s586
          %588 = dma.done %s584, 256
        $region56: #{tpu_custom_call.1} parent=51 // pred_fallthru
          _
      $region52: #{tpu_custom_call.1} parent=5 // pred_fallthru
        _
    $region6: #{tpu_custom_call.1} parent=1 // loop_footer
      %s21 = sadd.s32 1, %s17
    $region7: #{tpu_custom_call.1} parent=1 // loop_footer_branch
      %16 = sbr.rel target = $region3
    $region8: #{tpu_custom_call.1} parent=1 // loop_exit
      _
    %589 = vsyncpa [#allocation3], 1
    %s590 = scalar_lea.sflag [#allocation3], 1
    %591 = vsyncpa %s590, 1
    %592 = vsyncpa [#allocation4], 1
    %s593 = scalar_lea.sflag [#allocation4], 1
    %594 = vsyncpa %s593, 1

</llo_original>
